<compile_context>
chip_gen: v5e
topology: v5e:2x2
jax: 0.10.0
libtpu: 0.0.40
codegen_flags: <defaults>
</compile_context>

<pallas_src>
import math
from functools import partial

import jax
import jax.numpy as jnp
from jax.experimental import pallas as pl
from jax.experimental.pallas import tpu as pltpu


F1 = 26      # in_features_1
F2 = 37      # in_features_2
O1 = 32      # out_features_1
O2 = 48      # out_features_2
F2P = 40     # F2 zero-padded up to a multiple of 8 (sublane-aligned element stride)


# ----------------------------------------------------------------------------
# Fused kernel (one grid step processes gb elements)
#   h  = relu(X @ W1 + b1) @ W2 + b2                  # (gb*40, 32)   one batched pass
#   H  = lane-concat of per-element h slabs           # (40, gb*32)
#   out^T slab = W4^T @ relu(W3^T_pad @ H + b3^T) + b4^T   # (48, gb*32)  lane-dense
# ----------------------------------------------------------------------------
def _fused_mlp_kernel(x_ref, w1_ref, b1_ref, w2_ref, b2_ref,
                      w3tp_ref, b3c_ref, w4t_ref, b4c_ref, o_ref, *, gb):
    # Stage 1: single sublane-batched pass over all gb elements.
    x = x_ref[...]                                                        # (gb*40, 26)
    h = jnp.dot(x, w1_ref[...], preferred_element_type=jnp.float32) + b1_ref[...]
    h = jnp.maximum(h, 0.0)
    h = jnp.dot(h, w2_ref[...], preferred_element_type=jnp.float32) + b2_ref[...]   # (gb*40, 32)

    # Repack to a lane-batched layout: (40, gb*32).  Element stride 40 is
    # sublane aligned so each slice is clean; the 3 junk pad rows per element are
    # killed by the zero-padded columns of W3^T in stage 2.
    H = jnp.concatenate([h[e * F2P:(e + 1) * F2P, :] for e in range(gb)], axis=1)

    # Stage 2: transposed orientation (absorbs both transpose(2,3)), lane-batched.
    g = jnp.dot(w3tp_ref[...], H, preferred_element_type=jnp.float32) + b3c_ref[...]  # (148, gb*32)
    g = jnp.maximum(g, 0.0)
    o = jnp.dot(w4t_ref[...], g, preferred_element_type=jnp.float32) + b4c_ref[...]   # (48, gb*32)
    o_ref[...] = o.astype(o_ref.dtype)


# ----------------------------------------------------------------------------
# Parameter init (deterministic, PyTorch-Linear-style uniform bounds)
# Weights stored as (in_features, out_features) = W_pt.T; biases as (1, out).
# ----------------------------------------------------------------------------
def init_mlp_params(key, in_features_1=F1, in_features_2=F2,
                    out_features_1=O1, out_features_2=O2, dtype=jnp.float32):
    dims = [
        ("fc1", in_features_1, 4 * in_features_1),
        ("fc2", 4 * in_features_1, out_features_1),
        ("fc3", in_features_2, 4 * in_features_2),
        ("fc4", 4 * in_features_2, out_features_2),
    ]
    params = {}
    for name, fan_in, fan_out in dims:
        key, kw, kb = jax.random.split(key, 3)
        bound = 1.0 / math.sqrt(fan_in)
        params[name + "_w"] = jax.random.uniform(
            kw, (fan_in, fan_out), dtype, minval=-bound, maxval=bound)
        params[name + "_b"] = jax.random.uniform(
            kb, (1, fan_out), dtype, minval=-bound, maxval=bound)
    return params


def prepare_mlp_params(params):
    """One-time prep of kernel-ready operands (transposes / zero-padding are
    hoisted out of the per-call path)."""
    w3t = params["fc3_w"].T                                        # (148, 37)
    w3tp = jnp.pad(w3t, ((0, 0), (0, F2P - F2)))                   # (148, 40) zero cols
    return {
        "w1": params["fc1_w"], "b1": params["fc1_b"],              # (26,104), (1,104)
        "w2": params["fc2_w"], "b2": params["fc2_b"],              # (104,32), (1,32)
        "w3tp": w3tp, "b3c": params["fc3_b"].T,                    # (148,40), (148,1)
        "w4t": params["fc4_w"].T, "b4c": params["fc4_b"].T,        # (48,148), (48,1)
    }


# ----------------------------------------------------------------------------
# Full forward (matches PyTorch Mlp.forward semantics, drop=0.0)
# ----------------------------------------------------------------------------
def mlp_forward(x, kparams, *, grid_blocks=1):
    B, C, f2, f1 = x.shape                   # (B, C, 37, 26)
    assert (f2, f1) == (F2, F1), (f2, f1)
    BC = B * C
    assert BC % grid_blocks == 0
    gb = BC // grid_blocks                   # elements per grid step

    # Zero-pad the 37-row axis to 40 so the (BC,40,26)->(BC*40,26) collapse is a
    # free contiguous view and every per-element slice in the kernel is aligned.
    xp = jnp.pad(x.reshape(BC, F2, F1), ((0, 0), (0, F2P - F2), (0, 0)))
    xp = xp.reshape(BC * F2P, F1)            # contiguous view: no data movement

    w1, b1 = kparams["w1"], kparams["b1"]
    w2, b2 = kparams["w2"], kparams["b2"]
    w3tp, b3c = kparams["w3tp"], kparams["b3c"]
    w4t, b4c = kparams["w4t"], kparams["b4c"]

    kernel = partial(_fused_mlp_kernel, gb=gb)

    out = pl.pallas_call(
        kernel,
        out_shape=jax.ShapeDtypeStruct((O2, BC * O1), x.dtype),
        grid=(grid_blocks,),
        in_specs=[
            pl.BlockSpec((gb * F2P, F1), lambda i: (i, 0)),
            pl.BlockSpec(w1.shape, lambda i: (0, 0)),
            pl.BlockSpec(b1.shape, lambda i: (0, 0)),
            pl.BlockSpec(w2.shape, lambda i: (0, 0)),
            pl.BlockSpec(b2.shape, lambda i: (0, 0)),
            pl.BlockSpec(w3tp.shape, lambda i: (0, 0)),
            pl.BlockSpec(b3c.shape, lambda i: (0, 0)),
            pl.BlockSpec(w4t.shape, lambda i: (0, 0)),
            pl.BlockSpec(b4c.shape, lambda i: (0, 0)),
        ],
        out_specs=pl.BlockSpec((O2, gb * O1), lambda i: (0, i)),
        compiler_params=pltpu.CompilerParams(
            dimension_semantics=("parallel",),
            vmem_limit_bytes=32 * 1024 * 1024,   # explicit, v7x-safe (working set ~1 MiB)
        ),
    )(xp, w1, b1, w2, b2, w3tp, b3c, w4t, b4c)

    # Lane-dense (48, BC*32) slab -> (B, C, 48, 32); tiny wrapper-side plumbing.
    out = out.reshape(O2, BC, O1).transpose(1, 0, 2).reshape(B, C, O2, O1)
    return out


# ----------------------------------------------------------------------------
# Pure-JAX reference for a silent correctness check
# ----------------------------------------------------------------------------
def mlp_forward_ref(x, params):
    h = jnp.maximum(x @ params["fc1_w"] + params["fc1_b"][0], 0.0)
    h = h @ params["fc2_w"] + params["fc2_b"][0]
    h = jnp.swapaxes(h, 2, 3)
    h = jnp.maximum(h @ params["fc3_w"] + params["fc3_b"][0], 0.0)
    h = h @ params["fc4_w"] + params["fc4_b"][0]
    return jnp.swapaxes(h, 2, 3)


if __name__ == "__main__":
    key = jax.random.PRNGKey(0)
    kp, kx = jax.random.split(key)

    B, C = 2, 4
    params = init_mlp_params(kp)
    kparams = prepare_mlp_params(params)   # one-time weight prep (outside forward)

    # x: [B, C, in_features_2, in_features_1] = [2, 4, 37, 26]
    x = jax.random.normal(kx, (B, C, F2, F1), dtype=jnp.float32)

    out = mlp_forward(x, kparams)          # grid_blocks=2 is the v7x megacore option
    out = jax.block_until_ready(out)

    ref = mlp_forward_ref(x, params)
    assert out.shape == (B, C, O2, O1), out.shape
    assert jnp.allclose(out, ref, atol=1e-4, rtol=1e-4)

    print("KERNEL_OK")
</pallas_src>

<mosaic_0001>
module attributes {stable_mosaic.version = 11 : i64} {
  func.func @_fused_mlp_kernel(%arg0: i32, %arg1: memref<320x26xf32, #tpu.memory_space<vmem>>, %arg2: memref<26x104xf32, #tpu.memory_space<vmem>>, %arg3: memref<1x104xf32, #tpu.memory_space<vmem>>, %arg4: memref<104x32xf32, #tpu.memory_space<vmem>>, %arg5: memref<1x32xf32, #tpu.memory_space<vmem>>, %arg6: memref<148x40xf32, #tpu.memory_space<vmem>>, %arg7: memref<148x1xf32, #tpu.memory_space<vmem>>, %arg8: memref<48x148xf32, #tpu.memory_space<vmem>>, %arg9: memref<48x1xf32, #tpu.memory_space<vmem>>, %arg10: memref<48x256xf32, #tpu.memory_space<vmem>>) attributes {dimension_semantics = [#tpu.dimension_semantics<parallel>], iteration_bounds = array<i64: 1>, scalar_prefetch = 0 : i64, scratch_operands = 0 : i64, tpu.core_type = #tpu.core_type<tc>, window_params = [{transform_indices = @transform_0, window_bounds = array<i64: 320, 26>}, {pipeline_mode = #tpu.pipeline_mode<synchronous>, transform_indices = @transform_1, window_bounds = array<i64: 26, 104>}, {pipeline_mode = #tpu.pipeline_mode<synchronous>, transform_indices = @transform_2, window_bounds = array<i64: 1, 104>}, {pipeline_mode = #tpu.pipeline_mode<synchronous>, transform_indices = @transform_3, window_bounds = array<i64: 104, 32>}, {pipeline_mode = #tpu.pipeline_mode<synchronous>, transform_indices = @transform_4, window_bounds = array<i64: 1, 32>}, {pipeline_mode = #tpu.pipeline_mode<synchronous>, transform_indices = @transform_5, window_bounds = array<i64: 148, 40>}, {pipeline_mode = #tpu.pipeline_mode<synchronous>, transform_indices = @transform_6, window_bounds = array<i64: 148, 1>}, {pipeline_mode = #tpu.pipeline_mode<synchronous>, transform_indices = @transform_7, window_bounds = array<i64: 48, 148>}, {pipeline_mode = #tpu.pipeline_mode<synchronous>, transform_indices = @transform_8, window_bounds = array<i64: 48, 1>}, {transform_indices = @transform_9, window_bounds = array<i64: 48, 256>}]} {
    %c0 = arith.constant 0 : index
    %c0_0 = arith.constant 0 : index
    %0 = vector.load %arg1[%c0, %c0_0] : memref<320x26xf32, #tpu.memory_space<vmem>>, vector<320x26xf32>
    %c0_1 = arith.constant 0 : index
    %c0_2 = arith.constant 0 : index
    %1 = vector.load %arg2[%c0_1, %c0_2] : memref<26x104xf32, #tpu.memory_space<vmem>>, vector<26x104xf32>
    %cst = arith.constant dense<0.000000e+00> : vector<320x104xf32>
    %2 = tpu.matmul %0, %1, %cst {dimension_numbers = #tpu.dot_dimension_numbers<[1], [0], [0], [1], [0, 0, 1, 1], [], []>} : vector<320x26xf32>, vector<26x104xf32>, vector<320x104xf32> -> vector<320x104xf32>
    %c0_3 = arith.constant 0 : index
    %c0_4 = arith.constant 0 : index
    %3 = vector.load %arg3[%c0_3, %c0_4] : memref<1x104xf32, #tpu.memory_space<vmem>>, vector<1x104xf32>
    %4 = vector.broadcast %3 : vector<1x104xf32> to vector<320x104xf32>
    %5 = arith.addf %2, %4 : vector<320x104xf32>
    %cst_5 = arith.constant 0.000000e+00 : f32
    %6 = vector.broadcast %cst_5 : f32 to vector<320x104xf32>
    %7 = arith.maximumf %5, %6 : vector<320x104xf32>
    %c0_6 = arith.constant 0 : index
    %c0_7 = arith.constant 0 : index
    %8 = vector.load %arg4[%c0_6, %c0_7] : memref<104x32xf32, #tpu.memory_space<vmem>>, vector<104x32xf32>
    %cst_8 = arith.constant dense<0.000000e+00> : vector<320x32xf32>
    %9 = tpu.matmul %7, %8, %cst_8 {dimension_numbers = #tpu.dot_dimension_numbers<[1], [0], [0], [1], [0, 0, 1, 1], [], []>} : vector<320x104xf32>, vector<104x32xf32>, vector<320x32xf32> -> vector<320x32xf32>
    %c0_9 = arith.constant 0 : index
    %c0_10 = arith.constant 0 : index
    %10 = vector.load %arg5[%c0_9, %c0_10] : memref<1x32xf32, #tpu.memory_space<vmem>>, vector<1x32xf32>
    %11 = vector.broadcast %10 : vector<1x32xf32> to vector<320x32xf32>
    %12 = arith.addf %9, %11 : vector<320x32xf32>
    %13 = vector.extract_strided_slice %12 {offsets = [0, 0], sizes = [40, 32], strides = [1, 1]} : vector<320x32xf32> to vector<40x32xf32>
    %14 = vector.extract_strided_slice %12 {offsets = [40, 0], sizes = [40, 32], strides = [1, 1]} : vector<320x32xf32> to vector<40x32xf32>
    %15 = vector.extract_strided_slice %12 {offsets = [80, 0], sizes = [40, 32], strides = [1, 1]} : vector<320x32xf32> to vector<40x32xf32>
    %16 = vector.extract_strided_slice %12 {offsets = [120, 0], sizes = [40, 32], strides = [1, 1]} : vector<320x32xf32> to vector<40x32xf32>
    %17 = vector.extract_strided_slice %12 {offsets = [160, 0], sizes = [40, 32], strides = [1, 1]} : vector<320x32xf32> to vector<40x32xf32>
    %18 = vector.extract_strided_slice %12 {offsets = [200, 0], sizes = [40, 32], strides = [1, 1]} : vector<320x32xf32> to vector<40x32xf32>
    %19 = vector.extract_strided_slice %12 {offsets = [240, 0], sizes = [40, 32], strides = [1, 1]} : vector<320x32xf32> to vector<40x32xf32>
    %20 = vector.extract_strided_slice %12 {offsets = [280, 0], sizes = [40, 32], strides = [1, 1]} : vector<320x32xf32> to vector<40x32xf32>
    %21 = tpu.concatenate %13, %14, %15, %16, %17, %18, %19, %20 in 1 : vector<40x32xf32>, vector<40x32xf32>, vector<40x32xf32>, vector<40x32xf32>, vector<40x32xf32>, vector<40x32xf32>, vector<40x32xf32>, vector<40x32xf32> -> vector<40x256xf32>
    %c0_11 = arith.constant 0 : index
    %c0_12 = arith.constant 0 : index
    %22 = vector.load %arg6[%c0_11, %c0_12] : memref<148x40xf32, #tpu.memory_space<vmem>>, vector<148x40xf32>
    %cst_13 = arith.constant dense<0.000000e+00> : vector<148x256xf32>
    %23 = tpu.matmul %22, %21, %cst_13 {dimension_numbers = #tpu.dot_dimension_numbers<[1], [0], [0], [1], [0, 0, 1, 1], [], []>} : vector<148x40xf32>, vector<40x256xf32>, vector<148x256xf32> -> vector<148x256xf32>
    %c0_14 = arith.constant 0 : index
    %c0_15 = arith.constant 0 : index
    %24 = vector.load %arg7[%c0_14, %c0_15] : memref<148x1xf32, #tpu.memory_space<vmem>>, vector<148x1xf32>
    %25 = vector.broadcast %24 : vector<148x1xf32> to vector<148x256xf32>
    %26 = arith.addf %23, %25 : vector<148x256xf32>
    %cst_16 = arith.constant 0.000000e+00 : f32
    %27 = vector.broadcast %cst_16 : f32 to vector<148x256xf32>
    %28 = arith.maximumf %26, %27 : vector<148x256xf32>
    %c0_17 = arith.constant 0 : index
    %c0_18 = arith.constant 0 : index
    %29 = vector.load %arg8[%c0_17, %c0_18] : memref<48x148xf32, #tpu.memory_space<vmem>>, vector<48x148xf32>
    %cst_19 = arith.constant dense<0.000000e+00> : vector<48x256xf32>
    %30 = tpu.matmul %29, %28, %cst_19 {dimension_numbers = #tpu.dot_dimension_numbers<[1], [0], [0], [1], [0, 0, 1, 1], [], []>} : vector<48x148xf32>, vector<148x256xf32>, vector<48x256xf32> -> vector<48x256xf32>
    %c0_20 = arith.constant 0 : index
    %c0_21 = arith.constant 0 : index
    %31 = vector.load %arg9[%c0_20, %c0_21] : memref<48x1xf32, #tpu.memory_space<vmem>>, vector<48x1xf32>
    %32 = vector.broadcast %31 : vector<48x1xf32> to vector<48x256xf32>
    %33 = arith.addf %30, %32 : vector<48x256xf32>
    %c0_22 = arith.constant 0 : index
    %c0_23 = arith.constant 0 : index
    %34 = vector.load %arg10[%c0_22, %c0_23] : memref<48x256xf32, #tpu.memory_space<vmem>>, vector<48x256xf32>
    tpu.vector_store %arg10[%c0_22, %c0_23], %33 {strides = array<i32>} : memref<48x256xf32, #tpu.memory_space<vmem>>, vector<48x256xf32>,
    return
  }
  func.func @transform_0(%arg0: i32) -> (i32, i32) {
    %c0_i32 = arith.constant 0 : i32
    %c0_i32_0 = arith.constant 0 : i32
    return %arg0, %c0_i32 : i32, i32
  }
  func.func @transform_1(%arg0: i32) -> (i32, i32) {
    %c0_i32 = arith.constant 0 : i32
    %c0_i32_0 = arith.constant 0 : i32
    %c0_i32_1 = arith.constant 0 : i32
    return %c0_i32, %c0_i32_0 : i32, i32
  }
  func.func @transform_2(%arg0: i32) -> (i32, i32) {
    %c0_i32 = arith.constant 0 : i32
    %c0_i32_0 = arith.constant 0 : i32
    %c0_i32_1 = arith.constant 0 : i32
    return %c0_i32, %c0_i32_0 : i32, i32
  }
  func.func @transform_3(%arg0: i32) -> (i32, i32) {
    %c0_i32 = arith.constant 0 : i32
    %c0_i32_0 = arith.constant 0 : i32
    %c0_i32_1 = arith.constant 0 : i32
    return %c0_i32, %c0_i32_0 : i32, i32
  }
  func.func @transform_4(%arg0: i32) -> (i32, i32) {
    %c0_i32 = arith.constant 0 : i32
    %c0_i32_0 = arith.constant 0 : i32
    %c0_i32_1 = arith.constant 0 : i32
    return %c0_i32, %c0_i32_0 : i32, i32
  }
  func.func @transform_5(%arg0: i32) -> (i32, i32) {
    %c0_i32 = arith.constant 0 : i32
    %c0_i32_0 = arith.constant 0 : i32
    %c0_i32_1 = arith.constant 0 : i32
    return %c0_i32, %c0_i32_0 : i32, i32
  }
  func.func @transform_6(%arg0: i32) -> (i32, i32) {
    %c0_i32 = arith.constant 0 : i32
    %c0_i32_0 = arith.constant 0 : i32
    %c0_i32_1 = arith.constant 0 : i32
    return %c0_i32, %c0_i32_0 : i32, i32
  }
  func.func @transform_7(%arg0: i32) -> (i32, i32) {
    %c0_i32 = arith.constant 0 : i32
    %c0_i32_0 = arith.constant 0 : i32
    %c0_i32_1 = arith.constant 0 : i32
    return %c0_i32, %c0_i32_0 : i32, i32
  }
  func.func @transform_8(%arg0: i32) -> (i32, i32) {
    %c0_i32 = arith.constant 0 : i32
    %c0_i32_0 = arith.constant 0 : i32
    %c0_i32_1 = arith.constant 0 : i32
    return %c0_i32, %c0_i32_0 : i32, i32
  }
  func.func @transform_9(%arg0: i32) -> (i32, i32) {
    %c0_i32 = arith.constant 0 : i32
    %c0_i32_0 = arith.constant 0 : i32
    return %c0_i32, %arg0 : i32, i32
  }
}

</mosaic_0001>

<llo_original>
// kernel: tpu_custom_call.1
$region0: #{tpu_custom_call.1}
  #allocation0 [shape = 'u32[]', space=smem, size = 0x4, offset = 0x4, fixed_abs, tag = 'smem constant byte address 0x4 - core index']
  #allocation1 [shape = 'u32[72,128]{1,0:T(1,128)}', space=vmem, size = 0x9000, scoped, tag = 'internal scratch']
  %s0 = inlined_call_operand.vmem [shape: f32[320,26], index: 0, kind: input, shape index: {}]
  %s1 = inlined_call_operand.vmem [shape: f32[26,104], index: 1, kind: input, shape index: {}]
  %s2 = inlined_call_operand.vmem [shape: f32[1,104], index: 2, kind: input, shape index: {}]
  %s3 = inlined_call_operand.vmem [shape: f32[104,32], index: 3, kind: input, shape index: {}]
  %s4 = inlined_call_operand.vmem [shape: f32[1,32], index: 4, kind: input, shape index: {}]
  %s5 = inlined_call_operand.vmem [shape: f32[148,40], index: 5, kind: input, shape index: {}]
  %s6 = inlined_call_operand.vmem [shape: f32[148,1], index: 6, kind: input, shape index: {}]
  %s7 = inlined_call_operand.vmem [shape: f32[48,148], index: 7, kind: input, shape index: {}]
  %s8 = inlined_call_operand.vmem [shape: f32[48,1], index: 8, kind: input, shape index: {}]
  %s9 = inlined_call_operand.hbm [shape: f32[48,256], index: 9, kind: output, shape index: {}]
  %s10 = sld [smem:[#allocation0]]
  $region46: #{tpu_custom_call.1} parent=0
    _
  %s12 = ssub.s32 1, %s10
  %s13 = scalar_select 0, %s12, %s10
  $region1: #{tpu_custom_call.1} parent=0
    #allocation2 [shape = 'u8[49152]{0}', space=vmem, size = 0xc000, scoped, tag = 'output window, operand 0, single buffered']
    #allocation3 [shape = 's32[1]{0}', space=sflag, size = 0x4, scoped, tag = 'scoped memory for tpu_custom_call.1']
    %14 = vsyncpa [#allocation3], 0
    // Predicated region
    $region2: #{tpu_custom_call.1} parent=1 // pred_check
      _
    $region3: #{tpu_custom_call.1} parent=1 // pred_check_branch
      %16 = sbr.rel (0) target = $region5
    $region4: #{tpu_custom_call.1} parent=1 // pred_region
      _
    $region5: #{tpu_custom_call.1} parent=1 // pred_fallthru
      _
    // Predicated region
    $region6: #{tpu_custom_call.1} parent=1 // pred_check
      _
    $region7: #{tpu_custom_call.1} parent=1 // pred_check_branch
      %18 = sbr.rel (0) target = $region9
    $region8: #{tpu_custom_call.1} parent=1 // pred_region
      _
    $region9: #{tpu_custom_call.1} parent=1 // pred_fallthru
      _
    // Predicated region
    $region10: #{tpu_custom_call.1} parent=1 // pred_check
      _
    $region11: #{tpu_custom_call.1} parent=1 // pred_check_branch
      %20 = sbr.rel (0) target = $region13
    $region12: #{tpu_custom_call.1} parent=1 // pred_region
      _
    $region13: #{tpu_custom_call.1} parent=1 // pred_fallthru
      _
    // Predicated region
    $region14: #{tpu_custom_call.1} parent=1 // pred_check
      _
    $region15: #{tpu_custom_call.1} parent=1 // pred_check_branch
      %22 = sbr.rel (0) target = $region17
    $region16: #{tpu_custom_call.1} parent=1 // pred_region
      _
    $region17: #{tpu_custom_call.1} parent=1 // pred_fallthru
      _
    // Predicated region
    $region18: #{tpu_custom_call.1} parent=1 // pred_check
      _
    $region19: #{tpu_custom_call.1} parent=1 // pred_check_branch
      %24 = sbr.rel (0) target = $region21
    $region20: #{tpu_custom_call.1} parent=1 // pred_region
      _
    $region21: #{tpu_custom_call.1} parent=1 // pred_fallthru
      _
    // Predicated region
    $region22: #{tpu_custom_call.1} parent=1 // pred_check
      _
    $region23: #{tpu_custom_call.1} parent=1 // pred_check_branch
      %26 = sbr.rel (0) target = $region25
    $region24: #{tpu_custom_call.1} parent=1 // pred_region
      _
    $region25: #{tpu_custom_call.1} parent=1 // pred_fallthru
      _
    // Predicated region
    $region26: #{tpu_custom_call.1} parent=1 // pred_check
      _
    $region27: #{tpu_custom_call.1} parent=1 // pred_check_branch
      %28 = sbr.rel (0) target = $region29
    $region28: #{tpu_custom_call.1} parent=1 // pred_region
      _
    $region29: #{tpu_custom_call.1} parent=1 // pred_fallthru
      _
    // Predicated region
    $region30: #{tpu_custom_call.1} parent=1 // pred_check
      _
    $region31: #{tpu_custom_call.1} parent=1 // pred_check_branch
      %30 = sbr.rel (0) target = $region33
    $region32: #{tpu_custom_call.1} parent=1 // pred_region
      _
    $region33: #{tpu_custom_call.1} parent=1 // pred_fallthru
      _
    // Predicated region
    $region34: #{tpu_custom_call.1} parent=1 // pred_check
      _
    $region35: #{tpu_custom_call.1} parent=1 // pred_check_branch
      %32 = sbr.rel (0) target = $region37
    $region36: #{tpu_custom_call.1} parent=1 // pred_region
      _
    $region37: #{tpu_custom_call.1} parent=1 // pred_fallthru
      _
    %v33 = vld [vmem:[%s0] sm:$0xff]
    %v34 = vld [vmem:[%s0 + $0x8] sm:$0xff]
    %v35 = vld [vmem:[%s0 + $0x10] sm:$0xff]
    %v36 = vld [vmem:[%s0 + $0x18] sm:$0xff]
    %v37 = vld [vmem:[%s0 + $0x20] sm:$0xff]
    %v38 = vld [vmem:[%s0 + $0x28] sm:$0xff]
    %v39 = vld [vmem:[%s0 + $0x30] sm:$0xff]
    %v40 = vld [vmem:[%s0 + $0x38] sm:$0xff]
    %v41 = vld [vmem:[%s0 + $0x40] sm:$0xff]
    %v42 = vld [vmem:[%s0 + $0x48] sm:$0xff]
    %v43 = vld [vmem:[%s0 + $0x50] sm:$0xff]
    %v44 = vld [vmem:[%s0 + $0x58] sm:$0xff]
    %v45 = vld [vmem:[%s0 + $0x60] sm:$0xff]
    %v46 = vld [vmem:[%s0 + $0x68] sm:$0xff]
    %v47 = vld [vmem:[%s0 + $0x70] sm:$0xff]
    %v48 = vld [vmem:[%s0 + $0x78] sm:$0xff]
    %v49 = vld [vmem:[%s0 + $0x80] sm:$0xff]
    %v50 = vld [vmem:[%s0 + $0x88] sm:$0xff]
    %v51 = vld [vmem:[%s0 + $0x90] sm:$0xff]
    %v52 = vld [vmem:[%s0 + $0x98] sm:$0xff]
    %v53 = vld [vmem:[%s0 + $0xa0] sm:$0xff]
    %v54 = vld [vmem:[%s0 + $0xa8] sm:$0xff]
    %v55 = vld [vmem:[%s0 + $0xb0] sm:$0xff]
    %v56 = vld [vmem:[%s0 + $0xb8] sm:$0xff]
    %v57 = vld [vmem:[%s0 + $0xc0] sm:$0xff]
    %v58 = vld [vmem:[%s0 + $0xc8] sm:$0xff]
    %v59 = vld [vmem:[%s0 + $0xd0] sm:$0xff]
    %v60 = vld [vmem:[%s0 + $0xd8] sm:$0xff]
    %v61 = vld [vmem:[%s0 + $0xe0] sm:$0xff]
    %v62 = vld [vmem:[%s0 + $0xe8] sm:$0xff]
    %v63 = vld [vmem:[%s0 + $0xf0] sm:$0xff]
    %v64 = vld [vmem:[%s0 + $0xf8] sm:$0xff]
    %v65 = vld [vmem:[%s0 + $0x100] sm:$0xff]
    %v66 = vld [vmem:[%s0 + $0x108] sm:$0xff]
    %v67 = vld [vmem:[%s0 + $0x110] sm:$0xff]
    %v68 = vld [vmem:[%s0 + $0x118] sm:$0xff]
    %v69 = vld [vmem:[%s0 + $0x120] sm:$0xff]
    %v70 = vld [vmem:[%s0 + $0x128] sm:$0xff]
    %v71 = vld [vmem:[%s0 + $0x130] sm:$0xff]
    %v72 = vld [vmem:[%s0 + $0x138] sm:$0xff]
    %v73 = vld [vmem:[%s1] sm:$0xff]
    %v74 = vld [vmem:[%s1 + $0x8] sm:$0xff]
    %v75 = vld [vmem:[%s1 + $0x10] sm:$0xff]
    %v76 = vld [vmem:[%s1 + $0x18] sm:$0x3]
    %v77 = vld [vmem:[%s2] sm:$0x1]
    %v79 = vperm.slane %v77, 0
    %vm81 = vcmask 211968
    %v83 = vsel %vm81, %v33, 0
    %v86 = vsel %vm81, %v34, 0
    %v89 = vsel %vm81, %v35, 0
    %v92 = vsel %vm81, %v36, 0
    %v95 = vsel %vm81, %v37, 0
    %v98 = vsel %vm81, %v38, 0
    %v101 = vsel %vm81, %v39, 0
    %v104 = vsel %vm81, %v40, 0
    %v107 = vsel %vm81, %v41, 0
    %v110 = vsel %vm81, %v42, 0
    %v113 = vsel %vm81, %v43, 0
    %v116 = vsel %vm81, %v44, 0
    %v119 = vsel %vm81, %v45, 0
    %v122 = vsel %vm81, %v46, 0
    %v125 = vsel %vm81, %v47, 0
    %v128 = vsel %vm81, %v48, 0
    %v131 = vsel %vm81, %v49, 0
    %v134 = vsel %vm81, %v50, 0
    %v137 = vsel %vm81, %v51, 0
    %v140 = vsel %vm81, %v52, 0
    %v143 = vsel %vm81, %v53, 0
    %v146 = vsel %vm81, %v54, 0
    %v149 = vsel %vm81, %v55, 0
    %v152 = vsel %vm81, %v56, 0
    %v155 = vsel %vm81, %v57, 0
    %v158 = vsel %vm81, %v58, 0
    %v161 = vsel %vm81, %v59, 0
    %v164 = vsel %vm81, %v60, 0
    %v167 = vsel %vm81, %v61, 0
    %v170 = vsel %vm81, %v62, 0
    %v173 = vsel %vm81, %v63, 0
    %v176 = vsel %vm81, %v64, 0
    %v179 = vsel %vm81, %v65, 0
    %v182 = vsel %vm81, %v66, 0
    %v185 = vsel %vm81, %v67, 0
    %v188 = vsel %vm81, %v68, 0
    %v191 = vsel %vm81, %v69, 0
    %v194 = vsel %vm81, %v70, 0
    %v197 = vsel %vm81, %v71, 0
    %v200 = vsel %vm81, %v72, 0
    %vm202 = vcmask 1041408
    %v204 = vsel %vm202, %v76, 0
    %206 = vmatpush.msra.mxu0 0.0
    %207 = vmatpush.msra.mxu0 0.0
    %208 = vmatpush.msra.mxu0 0.0
    %209 = vmatpush.msra.mxu0 0.0
    %210 = vmatpush.msra.mxu0 0.0
    %211 = vmatpush.msra.mxu0 0.0
    %212 = vmatpush.msra.mxu0 0.0
    %213 = vmatpush.msra.mxu0 0.0
    %214 = vmatpush.msra.mxu0 0.0
    %215 = vmatpush.msra.mxu0 0.0
    %216 = vmatpush.msra.mxu0 0.0
    %217 = vmatpush.msra.mxu0 0.0
    %218 = vmatpush.msra.mxu0 %v204
    %219 = vmatpush.msra.mxu0 %v75
    %220 = vmatpush.msra.mxu0 %v74
    %221 = vmatpush.msra.mxu0 %v73
    %222 = vmatmul.f32.gmra.mxu0 %v83
    %v223 = vpop.f32.mrf.mxu0
    %v224 = vadd.f32 %v79, %v223
    %225 = vmatmul.f32.gmra.mxu0 %v86
    %v226 = vpop.f32.mrf.mxu0
    %v227 = vadd.f32 %v79, %v226
    %228 = vmatmul.f32.gmra.mxu0 %v89
    %v229 = vpop.f32.mrf.mxu0
    %v230 = vadd.f32 %v79, %v229
    %231 = vmatmul.f32.gmra.mxu0 %v92
    %v232 = vpop.f32.mrf.mxu0
    %v233 = vadd.f32 %v79, %v232
    %234 = vmatmul.f32.gmra.mxu0 %v95
    %v235 = vpop.f32.mrf.mxu0
    %v236 = vadd.f32 %v79, %v235
    %237 = vmatmul.f32.gmra.mxu0 %v98
    %v238 = vpop.f32.mrf.mxu0
    %v239 = vadd.f32 %v79, %v238
    %240 = vmatmul.f32.gmra.mxu0 %v101
    %v241 = vpop.f32.mrf.mxu0
    %v242 = vadd.f32 %v79, %v241
    %243 = vmatmul.f32.gmra.mxu0 %v104
    %v244 = vpop.f32.mrf.mxu0
    %v245 = vadd.f32 %v79, %v244
    %246 = vmatmul.f32.gmra.mxu0 %v107
    %v247 = vpop.f32.mrf.mxu0
    %v248 = vadd.f32 %v79, %v247
    %249 = vmatmul.f32.gmra.mxu0 %v110
    %v250 = vpop.f32.mrf.mxu0
    %v251 = vadd.f32 %v79, %v250
    %252 = vmatmul.f32.gmra.mxu0 %v113
    %v253 = vpop.f32.mrf.mxu0
    %v254 = vadd.f32 %v79, %v253
    %255 = vmatmul.f32.gmra.mxu0 %v116
    %v256 = vpop.f32.mrf.mxu0
    %v257 = vadd.f32 %v79, %v256
    %258 = vmatmul.f32.gmra.mxu0 %v119
    %v259 = vpop.f32.mrf.mxu0
    %v260 = vadd.f32 %v79, %v259
    %261 = vmatmul.f32.gmra.mxu0 %v122
    %v262 = vpop.f32.mrf.mxu0
    %v263 = vadd.f32 %v79, %v262
    %264 = vmatmul.f32.gmra.mxu0 %v125
    %v265 = vpop.f32.mrf.mxu0
    %v266 = vadd.f32 %v79, %v265
    %267 = vmatmul.f32.gmra.mxu0 %v128
    %v268 = vpop.f32.mrf.mxu0
    %v269 = vadd.f32 %v79, %v268
    %270 = vmatmul.f32.gmra.mxu0 %v131
    %v271 = vpop.f32.mrf.mxu0
    %v272 = vadd.f32 %v79, %v271
    %273 = vmatmul.f32.gmra.mxu0 %v134
    %v274 = vpop.f32.mrf.mxu0
    %v275 = vadd.f32 %v79, %v274
    %276 = vmatmul.f32.gmra.mxu0 %v137
    %v277 = vpop.f32.mrf.mxu0
    %v278 = vadd.f32 %v79, %v277
    %279 = vmatmul.f32.gmra.mxu0 %v140
    %v280 = vpop.f32.mrf.mxu0
    %v281 = vadd.f32 %v79, %v280
    %282 = vmatmul.f32.gmra.mxu0 %v143
    %v283 = vpop.f32.mrf.mxu0
    %v284 = vadd.f32 %v79, %v283
    %285 = vmatmul.f32.gmra.mxu0 %v146
    %v286 = vpop.f32.mrf.mxu0
    %v287 = vadd.f32 %v79, %v286
    %288 = vmatmul.f32.gmra.mxu0 %v149
    %v289 = vpop.f32.mrf.mxu0
    %v290 = vadd.f32 %v79, %v289
    %291 = vmatmul.f32.gmra.mxu0 %v152
    %v292 = vpop.f32.mrf.mxu0
    %v293 = vadd.f32 %v79, %v292
    %294 = vmatmul.f32.gmra.mxu0 %v155
    %v295 = vpop.f32.mrf.mxu0
    %v296 = vadd.f32 %v79, %v295
    %297 = vmatmul.f32.gmra.mxu0 %v158
    %v298 = vpop.f32.mrf.mxu0
    %v299 = vadd.f32 %v79, %v298
    %300 = vmatmul.f32.gmra.mxu0 %v161
    %v301 = vpop.f32.mrf.mxu0
    %v302 = vadd.f32 %v79, %v301
    %303 = vmatmul.f32.gmra.mxu0 %v164
    %v304 = vpop.f32.mrf.mxu0
    %v305 = vadd.f32 %v79, %v304
    %306 = vmatmul.f32.gmra.mxu0 %v167
    %v307 = vpop.f32.mrf.mxu0
    %v308 = vadd.f32 %v79, %v307
    %309 = vmatmul.f32.gmra.mxu0 %v170
    %v310 = vpop.f32.mrf.mxu0
    %v311 = vadd.f32 %v79, %v310
    %312 = vmatmul.f32.gmra.mxu0 %v173
    %v313 = vpop.f32.mrf.mxu0
    %v314 = vadd.f32 %v79, %v313
    %315 = vmatmul.f32.gmra.mxu0 %v176
    %v316 = vpop.f32.mrf.mxu0
    %v317 = vadd.f32 %v79, %v316
    %318 = vmatmul.f32.gmra.mxu0 %v179
    %v319 = vpop.f32.mrf.mxu0
    %v320 = vadd.f32 %v79, %v319
    %321 = vmatmul.f32.gmra.mxu0 %v182
    %v322 = vpop.f32.mrf.mxu0
    %v323 = vadd.f32 %v79, %v322
    %324 = vmatmul.f32.gmra.mxu0 %v185
    %v325 = vpop.f32.mrf.mxu0
    %v326 = vadd.f32 %v79, %v325
    %327 = vmatmul.f32.gmra.mxu0 %v188
    %v328 = vpop.f32.mrf.mxu0
    %v329 = vadd.f32 %v79, %v328
    %330 = vmatmul.f32.gmra.mxu0 %v191
    %v331 = vpop.f32.mrf.mxu0
    %v332 = vadd.f32 %v79, %v331
    %333 = vmatmul.f32.gmra.mxu0 %v194
    %v334 = vpop.f32.mrf.mxu0
    %v335 = vadd.f32 %v79, %v334
    %336 = vmatmul.f32.gmra.mxu0 %v197
    %v337 = vpop.f32.mrf.mxu0
    %v338 = vadd.f32 %v79, %v337
    %339 = vmatmul.f32.gmra.mxu0 %v200
    %v340 = vpop.f32.mrf.mxu0
    %v341 = vadd.f32 %v79, %v340
    %342 = vdwg.mxu0
    %v343 = vmax.f32 %v224, 0.0
    %v344 = vmax.f32 %v227, 0.0
    %v345 = vmax.f32 %v230, 0.0
    %v346 = vmax.f32 %v233, 0.0
    %v347 = vmax.f32 %v236, 0.0
    %v348 = vmax.f32 %v239, 0.0
    %v349 = vmax.f32 %v242, 0.0
    %v350 = vmax.f32 %v245, 0.0
    %v351 = vmax.f32 %v248, 0.0
    %v352 = vmax.f32 %v251, 0.0
    %v353 = vmax.f32 %v254, 0.0
    %v354 = vmax.f32 %v257, 0.0
    %v355 = vmax.f32 %v260, 0.0
    %v356 = vmax.f32 %v263, 0.0
    %v357 = vmax.f32 %v266, 0.0
    %v358 = vmax.f32 %v269, 0.0
    %v359 = vmax.f32 %v272, 0.0
    %v360 = vmax.f32 %v275, 0.0
    %v361 = vmax.f32 %v278, 0.0
    %v362 = vmax.f32 %v281, 0.0
    %v363 = vmax.f32 %v284, 0.0
    %v364 = vmax.f32 %v287, 0.0
    %v365 = vmax.f32 %v290, 0.0
    %v366 = vmax.f32 %v293, 0.0
    %v367 = vmax.f32 %v296, 0.0
    %v368 = vmax.f32 %v299, 0.0
    %v369 = vmax.f32 %v302, 0.0
    %v370 = vmax.f32 %v305, 0.0
    %v371 = vmax.f32 %v308, 0.0
    %v372 = vmax.f32 %v311, 0.0
    %v373 = vmax.f32 %v314, 0.0
    %v374 = vmax.f32 %v317, 0.0
    %v375 = vmax.f32 %v320, 0.0
    %v376 = vmax.f32 %v323, 0.0
    %v377 = vmax.f32 %v326, 0.0
    %v378 = vmax.f32 %v329, 0.0
    %v379 = vmax.f32 %v332, 0.0
    %v380 = vmax.f32 %v335, 0.0
    %v381 = vmax.f32 %v338, 0.0
    %v382 = vmax.f32 %v341, 0.0
    %v383 = vld [vmem:[%s3] sm:$0xff]
    %v384 = vld [vmem:[%s3 + $0x8] sm:$0xff]
    %v385 = vld [vmem:[%s3 + $0x10] sm:$0xff]
    %v386 = vld [vmem:[%s3 + $0x18] sm:$0xff]
    %v387 = vld [vmem:[%s3 + $0x20] sm:$0xff]
    %v388 = vld [vmem:[%s3 + $0x28] sm:$0xff]
    %v389 = vld [vmem:[%s3 + $0x30] sm:$0xff]
    %v390 = vld [vmem:[%s3 + $0x38] sm:$0xff]
    %v391 = vld [vmem:[%s3 + $0x40] sm:$0xff]
    %v392 = vld [vmem:[%s3 + $0x48] sm:$0xff]
    %v393 = vld [vmem:[%s3 + $0x50] sm:$0xff]
    %v394 = vld [vmem:[%s3 + $0x58] sm:$0xff]
    %v395 = vld [vmem:[%s3 + $0x60] sm:$0xff]
    %v396 = vld [vmem:[%s4] sm:$0x1]
    %v398 = vperm.slane %v396, 0
    %vm400 = vcmask 850944
    %v402 = vsel %vm400, %v343, 0
    %v405 = vsel %vm400, %v344, 0
    %v408 = vsel %vm400, %v345, 0
    %v411 = vsel %vm400, %v346, 0
    %v414 = vsel %vm400, %v347, 0
    %v417 = vsel %vm400, %v348, 0
    %v420 = vsel %vm400, %v349, 0
    %v423 = vsel %vm400, %v350, 0
    %v426 = vsel %vm400, %v351, 0
    %v429 = vsel %vm400, %v352, 0
    %v432 = vsel %vm400, %v353, 0
    %v435 = vsel %vm400, %v354, 0
    %v438 = vsel %vm400, %v355, 0
    %v441 = vsel %vm400, %v356, 0
    %v444 = vsel %vm400, %v357, 0
    %v447 = vsel %vm400, %v358, 0
    %v450 = vsel %vm400, %v359, 0
    %v453 = vsel %vm400, %v360, 0
    %v456 = vsel %vm400, %v361, 0
    %v459 = vsel %vm400, %v362, 0
    %v462 = vsel %vm400, %v363, 0
    %v465 = vsel %vm400, %v364, 0
    %v468 = vsel %vm400, %v365, 0
    %v471 = vsel %vm400, %v366, 0
    %v474 = vsel %vm400, %v367, 0
    %v477 = vsel %vm400, %v368, 0
    %v480 = vsel %vm400, %v369, 0
    %v483 = vsel %vm400, %v370, 0
    %v486 = vsel %vm400, %v371, 0
    %v489 = vsel %vm400, %v372, 0
    %v492 = vsel %vm400, %v373, 0
    %v495 = vsel %vm400, %v374, 0
    %v498 = vsel %vm400, %v375, 0
    %v501 = vsel %vm400, %v376, 0
    %v504 = vsel %vm400, %v377, 0
    %v507 = vsel %vm400, %v378, 0
    %v510 = vsel %vm400, %v379, 0
    %v513 = vsel %vm400, %v380, 0
    %v516 = vsel %vm400, %v381, 0
    %v519 = vsel %vm400, %v382, 0
    %521 = vmatpush.msra.mxu0 0.0
    %522 = vmatpush.msra.mxu0 0.0
    %523 = vmatpush.msra.mxu0 0.0
    %524 = vmatpush.msra.mxu0 %v395
    %525 = vmatpush.msra.mxu0 %v394
    %526 = vmatpush.msra.mxu0 %v393
    %527 = vmatpush.msra.mxu0 %v392
    %528 = vmatpush.msra.mxu0 %v391
    %529 = vmatpush.msra.mxu0 %v390
    %530 = vmatpush.msra.mxu0 %v389
    %531 = vmatpush.msra.mxu0 %v388
    %532 = vmatpush.msra.mxu0 %v387
    %533 = vmatpush.msra.mxu0 %v386
    %534 = vmatpush.msra.mxu0 %v385
    %535 = vmatpush.msra.mxu0 %v384
    %536 = vmatpush.msra.mxu0 %v383
    %537 = vmatmul.f32.gmra.mxu0 %v402
    %v538 = vpop.f32.mrf.mxu0
    %v539 = vadd.f32 %v398, %v538
    %540 = vmatmul.f32.gmra.mxu0 %v405
    %v541 = vpop.f32.mrf.mxu0
    %v542 = vadd.f32 %v398, %v541
    %543 = vmatmul.f32.gmra.mxu0 %v408
    %v544 = vpop.f32.mrf.mxu0
    %v545 = vadd.f32 %v398, %v544
    %546 = vmatmul.f32.gmra.mxu0 %v411
    %v547 = vpop.f32.mrf.mxu0
    %v548 = vadd.f32 %v398, %v547
    %549 = vmatmul.f32.gmra.mxu0 %v414
    %v550 = vpop.f32.mrf.mxu0
    %v551 = vadd.f32 %v398, %v550
    %552 = vmatmul.f32.gmra.mxu0 %v417
    %v553 = vpop.f32.mrf.mxu0
    %v554 = vadd.f32 %v398, %v553
    %555 = vmatmul.f32.gmra.mxu0 %v420
    %v556 = vpop.f32.mrf.mxu0
    %v557 = vadd.f32 %v398, %v556
    %558 = vmatmul.f32.gmra.mxu0 %v423
    %v559 = vpop.f32.mrf.mxu0
    %v560 = vadd.f32 %v398, %v559
    %561 = vmatmul.f32.gmra.mxu0 %v426
    %v562 = vpop.f32.mrf.mxu0
    %v563 = vadd.f32 %v398, %v562
    %564 = vmatmul.f32.gmra.mxu0 %v429
    %v565 = vpop.f32.mrf.mxu0
    %v566 = vadd.f32 %v398, %v565
    %567 = vmatmul.f32.gmra.mxu0 %v432
    %v568 = vpop.f32.mrf.mxu0
    %v569 = vadd.f32 %v398, %v568
    %570 = vmatmul.f32.gmra.mxu0 %v435
    %v571 = vpop.f32.mrf.mxu0
    %v572 = vadd.f32 %v398, %v571
    %573 = vmatmul.f32.gmra.mxu0 %v438
    %v574 = vpop.f32.mrf.mxu0
    %v575 = vadd.f32 %v398, %v574
    %576 = vmatmul.f32.gmra.mxu0 %v441
    %v577 = vpop.f32.mrf.mxu0
    %v578 = vadd.f32 %v398, %v577
    %579 = vmatmul.f32.gmra.mxu0 %v444
    %v580 = vpop.f32.mrf.mxu0
    %v581 = vadd.f32 %v398, %v580
    %582 = vmatmul.f32.gmra.mxu0 %v447
    %v583 = vpop.f32.mrf.mxu0
    %v584 = vadd.f32 %v398, %v583
    %585 = vmatmul.f32.gmra.mxu0 %v450
    %v586 = vpop.f32.mrf.mxu0
    %v587 = vadd.f32 %v398, %v586
    %588 = vmatmul.f32.gmra.mxu0 %v453
    %v589 = vpop.f32.mrf.mxu0
    %v590 = vadd.f32 %v398, %v589
    %591 = vmatmul.f32.gmra.mxu0 %v456
    %v592 = vpop.f32.mrf.mxu0
    %v593 = vadd.f32 %v398, %v592
    %594 = vmatmul.f32.gmra.mxu0 %v459
    %v595 = vpop.f32.mrf.mxu0
    %v596 = vadd.f32 %v398, %v595
    %597 = vmatmul.f32.gmra.mxu0 %v462
    %v598 = vpop.f32.mrf.mxu0
    %v599 = vadd.f32 %v398, %v598
    %600 = vmatmul.f32.gmra.mxu0 %v465
    %v601 = vpop.f32.mrf.mxu0
    %v602 = vadd.f32 %v398, %v601
    %603 = vmatmul.f32.gmra.mxu0 %v468
    %v604 = vpop.f32.mrf.mxu0
    %v605 = vadd.f32 %v398, %v604
    %606 = vmatmul.f32.gmra.mxu0 %v471
    %v607 = vpop.f32.mrf.mxu0
    %v608 = vadd.f32 %v398, %v607
    %609 = vmatmul.f32.gmra.mxu0 %v474
    %v610 = vpop.f32.mrf.mxu0
    %v611 = vadd.f32 %v398, %v610
    %612 = vmatmul.f32.gmra.mxu0 %v477
    %v613 = vpop.f32.mrf.mxu0
    %v614 = vadd.f32 %v398, %v613
    %615 = vmatmul.f32.gmra.mxu0 %v480
    %v616 = vpop.f32.mrf.mxu0
    %v617 = vadd.f32 %v398, %v616
    %618 = vmatmul.f32.gmra.mxu0 %v483
    %v619 = vpop.f32.mrf.mxu0
    %v620 = vadd.f32 %v398, %v619
    %621 = vmatmul.f32.gmra.mxu0 %v486
    %v622 = vpop.f32.mrf.mxu0
    %v623 = vadd.f32 %v398, %v622
    %624 = vmatmul.f32.gmra.mxu0 %v489
    %v625 = vpop.f32.mrf.mxu0
    %v626 = vadd.f32 %v398, %v625
    %627 = vmatmul.f32.gmra.mxu0 %v492
    %v628 = vpop.f32.mrf.mxu0
    %v629 = vadd.f32 %v398, %v628
    %630 = vmatmul.f32.gmra.mxu0 %v495
    %v631 = vpop.f32.mrf.mxu0
    %v632 = vadd.f32 %v398, %v631
    %633 = vmatmul.f32.gmra.mxu0 %v498
    %v634 = vpop.f32.mrf.mxu0
    %v635 = vadd.f32 %v398, %v634
    %636 = vmatmul.f32.gmra.mxu0 %v501
    %v637 = vpop.f32.mrf.mxu0
    %v638 = vadd.f32 %v398, %v637
    %639 = vmatmul.f32.gmra.mxu0 %v504
    %v640 = vpop.f32.mrf.mxu0
    %v641 = vadd.f32 %v398, %v640
    %642 = vmatmul.f32.gmra.mxu0 %v507
    %v643 = vpop.f32.mrf.mxu0
    %v644 = vadd.f32 %v398, %v643
    %645 = vmatmul.f32.gmra.mxu0 %v510
    %v646 = vpop.f32.mrf.mxu0
    %v647 = vadd.f32 %v398, %v646
    %648 = vmatmul.f32.gmra.mxu0 %v513
    %v649 = vpop.f32.mrf.mxu0
    %v650 = vadd.f32 %v398, %v649
    %651 = vmatmul.f32.gmra.mxu0 %v516
    %v652 = vpop.f32.mrf.mxu0
    %v653 = vadd.f32 %v398, %v652
    %654 = vmatmul.f32.gmra.mxu0 %v519
    %v655 = vpop.f32.mrf.mxu0
    %v656 = vadd.f32 %v398, %v655
    %657 = vdwg.mxu0
    %663 = vrot.lane.b32.xlu0 %v554, 32
    %v664 = vpop.permute.xlu0 %663
    %665 = vrot.lane.b32.xlu0 %v557, 32
    %v666 = vpop.permute.xlu0 %665
    %667 = vrot.lane.b32.xlu0 %v560, 32
    %v668 = vpop.permute.xlu0 %667
    %669 = vrot.lane.b32.xlu0 %v563, 32
    %v670 = vpop.permute.xlu0 %669
    %671 = vrot.lane.b32.xlu0 %v566, 32
    %v672 = vpop.permute.xlu0 %671
    %683 = vrot.lane.b32.xlu0 %v569, 64
    %v684 = vpop.permute.xlu0 %683
    %685 = vrot.lane.b32.xlu0 %v572, 64
    %v686 = vpop.permute.xlu0 %685
    %687 = vrot.lane.b32.xlu0 %v575, 64
    %v688 = vpop.permute.xlu0 %687
    %689 = vrot.lane.b32.xlu0 %v578, 64
    %v690 = vpop.permute.xlu0 %689
    %691 = vrot.lane.b32.xlu0 %v581, 64
    %v692 = vpop.permute.xlu0 %691
    %703 = vrot.lane.b32.xlu0 %v584, 96
    %v704 = vpop.permute.xlu0 %703
    %705 = vrot.lane.b32.xlu0 %v587, 96
    %v706 = vpop.permute.xlu0 %705
    %707 = vrot.lane.b32.xlu0 %v590, 96
    %v708 = vpop.permute.xlu0 %707
    %709 = vrot.lane.b32.xlu0 %v593, 96
    %v710 = vpop.permute.xlu0 %709
    %711 = vrot.lane.b32.xlu0 %v596, 96
    %v712 = vpop.permute.xlu0 %711
    %723 = vrot.lane.b32.xlu0 %v614, 32
    %v724 = vpop.permute.xlu0 %723
    %725 = vrot.lane.b32.xlu0 %v617, 32
    %v726 = vpop.permute.xlu0 %725
    %727 = vrot.lane.b32.xlu0 %v620, 32
    %v728 = vpop.permute.xlu0 %727
    %729 = vrot.lane.b32.xlu0 %v623, 32
    %v730 = vpop.permute.xlu0 %729
    %731 = vrot.lane.b32.xlu0 %v626, 32
    %v732 = vpop.permute.xlu0 %731
    %743 = vrot.lane.b32.xlu0 %v629, 64
    %v744 = vpop.permute.xlu0 %743
    %745 = vrot.lane.b32.xlu0 %v632, 64
    %v746 = vpop.permute.xlu0 %745
    %747 = vrot.lane.b32.xlu0 %v635, 64
    %v748 = vpop.permute.xlu0 %747
    %749 = vrot.lane.b32.xlu0 %v638, 64
    %v750 = vpop.permute.xlu0 %749
    %751 = vrot.lane.b32.xlu0 %v641, 64
    %v752 = vpop.permute.xlu0 %751
    %763 = vrot.lane.b32.xlu0 %v644, 96
    %v764 = vpop.permute.xlu0 %763
    %765 = vrot.lane.b32.xlu0 %v647, 96
    %v766 = vpop.permute.xlu0 %765
    %767 = vrot.lane.b32.xlu0 %v650, 96
    %v768 = vpop.permute.xlu0 %767
    %769 = vrot.lane.b32.xlu0 %v653, 96
    %v770 = vpop.permute.xlu0 %769
    %771 = vrot.lane.b32.xlu0 %v656, 96
    %v772 = vpop.permute.xlu0 %771
    %vm778 = vcmask 261120
    %v779 = vsel %vm778, %v539, %v664
    %v780 = vsel %vm778, %v542, %v666
    %v781 = vsel %vm778, %v545, %v668
    %v782 = vsel %vm778, %v548, %v670
    %v783 = vsel %vm778, %v551, %v672
    %vm784 = vcmask 523264
    %v785 = vsel %vm784, %v779, %v684
    %v786 = vsel %vm784, %v780, %v686
    %v787 = vsel %vm784, %v781, %v688
    %v788 = vsel %vm784, %v782, %v690
    %v789 = vsel %vm784, %v783, %v692
    %vm790 = vcmask 785408
    %v791 = vsel %vm790, %v785, %v704
    %v792 = vsel %vm790, %v786, %v706
    %v793 = vsel %vm790, %v787, %v708
    %v794 = vsel %vm790, %v788, %v710
    %v795 = vsel %vm790, %v789, %v712
    %v796 = vsel %vm778, %v599, %v724
    %v797 = vsel %vm778, %v602, %v726
    %v798 = vsel %vm778, %v605, %v728
    %v799 = vsel %vm778, %v608, %v730
    %v800 = vsel %vm778, %v611, %v732
    %v801 = vsel %vm784, %v796, %v744
    %v802 = vsel %vm784, %v797, %v746
    %v803 = vsel %vm784, %v798, %v748
    %v804 = vsel %vm784, %v799, %v750
    %v805 = vsel %vm784, %v800, %v752
    %v806 = vsel %vm790, %v801, %v764
    %v807 = vsel %vm790, %v802, %v766
    %v808 = vsel %vm790, %v803, %v768
    %v809 = vsel %vm790, %v804, %v770
    %v810 = vsel %vm790, %v805, %v772
    %v811 = vld [vmem:[%s5] sm:$0xff]
    %v812 = vld [vmem:[%s5 + $0x8] sm:$0xff]
    %v813 = vld [vmem:[%s5 + $0x10] sm:$0xff]
    %v814 = vld [vmem:[%s5 + $0x18] sm:$0xff]
    %v815 = vld [vmem:[%s5 + $0x20] sm:$0xff]
    %v816 = vld [vmem:[%s5 + $0x28] sm:$0xff]
    %v817 = vld [vmem:[%s5 + $0x30] sm:$0xff]
    %v818 = vld [vmem:[%s5 + $0x38] sm:$0xff]
    %v819 = vld [vmem:[%s5 + $0x40] sm:$0xff]
    %v820 = vld [vmem:[%s5 + $0x48] sm:$0xff]
    %v821 = vld [vmem:[%s5 + $0x50] sm:$0xff]
    %v822 = vld [vmem:[%s5 + $0x58] sm:$0xff]
    %v823 = vld [vmem:[%s5 + $0x60] sm:$0xff]
    %v824 = vld [vmem:[%s5 + $0x68] sm:$0xff]
    %v825 = vld [vmem:[%s5 + $0x70] sm:$0xff]
    %v826 = vld [vmem:[%s5 + $0x78] sm:$0xff]
    %v827 = vld [vmem:[%s5 + $0x80] sm:$0xff]
    %v828 = vld [vmem:[%s5 + $0x88] sm:$0xff]
    %v829 = vld [vmem:[%s5 + $0x90] sm:$0xf]
    %v830 = vld [vmem:[%s6] sm:$0xff]
    %v831 = vld [vmem:[%s6 + $0x8] sm:$0xff]
    %v832 = vld [vmem:[%s6 + $0x10] sm:$0xff]
    %v833 = vld [vmem:[%s6 + $0x18] sm:$0xff]
    %v834 = vld [vmem:[%s6 + $0x20] sm:$0xff]
    %v835 = vld [vmem:[%s6 + $0x28] sm:$0xff]
    %v836 = vld [vmem:[%s6 + $0x30] sm:$0xff]
    %v837 = vld [vmem:[%s6 + $0x38] sm:$0xff]
    %v838 = vld [vmem:[%s6 + $0x40] sm:$0xff]
    %v839 = vld [vmem:[%s6 + $0x48] sm:$0xff]
    %v840 = vld [vmem:[%s6 + $0x50] sm:$0xff]
    %v841 = vld [vmem:[%s6 + $0x58] sm:$0xff]
    %v842 = vld [vmem:[%s6 + $0x60] sm:$0xff]
    %v843 = vld [vmem:[%s6 + $0x68] sm:$0xff]
    %v844 = vld [vmem:[%s6 + $0x70] sm:$0xff]
    %v845 = vld [vmem:[%s6 + $0x78] sm:$0xff]
    %v846 = vld [vmem:[%s6 + $0x80] sm:$0xff]
    %v847 = vld [vmem:[%s6 + $0x88] sm:$0xff]
    %v848 = vld [vmem:[%s6 + $0x90] sm:$0xf]
    %850 = vset.pattern.permute.xlu0 0
    %851 = vperm.xlu0 %850, %v830
    %v852 = vpop.permute.xlu0 %851
    %855 = vset.pattern.permute.xlu0 0
    %856 = vperm.xlu0 %855, %v831
    %v857 = vpop.permute.xlu0 %856
    %860 = vset.pattern.permute.xlu0 0
    %861 = vperm.xlu0 %860, %v832
    %v862 = vpop.permute.xlu0 %861
    %865 = vset.pattern.permute.xlu0 0
    %866 = vperm.xlu0 %865, %v833
    %v867 = vpop.permute.xlu0 %866
    %870 = vset.pattern.permute.xlu0 0
    %871 = vperm.xlu0 %870, %v834
    %v872 = vpop.permute.xlu0 %871
    %875 = vset.pattern.permute.xlu0 0
    %876 = vperm.xlu0 %875, %v835
    %v877 = vpop.permute.xlu0 %876
    %880 = vset.pattern.permute.xlu0 0
    %881 = vperm.xlu0 %880, %v836
    %v882 = vpop.permute.xlu0 %881
    %885 = vset.pattern.permute.xlu0 0
    %886 = vperm.xlu0 %885, %v837
    %v887 = vpop.permute.xlu0 %886
    %890 = vset.pattern.permute.xlu0 0
    %891 = vperm.xlu0 %890, %v838
    %v892 = vpop.permute.xlu0 %891
    %895 = vset.pattern.permute.xlu0 0
    %896 = vperm.xlu0 %895, %v839
    %v897 = vpop.permute.xlu0 %896
    %900 = vset.pattern.permute.xlu0 0
    %901 = vperm.xlu0 %900, %v840
    %v902 = vpop.permute.xlu0 %901
    %905 = vset.pattern.permute.xlu0 0
    %906 = vperm.xlu0 %905, %v841
    %v907 = vpop.permute.xlu0 %906
    %910 = vset.pattern.permute.xlu0 0
    %911 = vperm.xlu0 %910, %v842
    %v912 = vpop.permute.xlu0 %911
    %915 = vset.pattern.permute.xlu0 0
    %916 = vperm.xlu0 %915, %v843
    %v917 = vpop.permute.xlu0 %916
    %920 = vset.pattern.permute.xlu0 0
    %921 = vperm.xlu0 %920, %v844
    %v922 = vpop.permute.xlu0 %921
    %925 = vset.pattern.permute.xlu0 0
    %926 = vperm.xlu0 %925, %v845
    %v927 = vpop.permute.xlu0 %926
    %930 = vset.pattern.permute.xlu0 0
    %931 = vperm.xlu0 %930, %v846
    %v932 = vpop.permute.xlu0 %931
    %935 = vset.pattern.permute.xlu0 0
    %936 = vperm.xlu0 %935, %v847
    %v937 = vpop.permute.xlu0 %936
    %940 = vset.pattern.permute.xlu0 0
    %941 = vperm.xlu0 %940, %v848
    %v942 = vpop.permute.xlu0 %941
    %vm944 = vcmask 326656
    %v946 = vsel %vm944, %v811, 0
    %v949 = vsel %vm944, %v812, 0
    %v952 = vsel %vm944, %v813, 0
    %v955 = vsel %vm944, %v814, 0
    %v958 = vsel %vm944, %v815, 0
    %v961 = vsel %vm944, %v816, 0
    %v964 = vsel %vm944, %v817, 0
    %v967 = vsel %vm944, %v818, 0
    %v970 = vsel %vm944, %v819, 0
    %v973 = vsel %vm944, %v820, 0
    %v976 = vsel %vm944, %v821, 0
    %v979 = vsel %vm944, %v822, 0
    %v982 = vsel %vm944, %v823, 0
    %v985 = vsel %vm944, %v824, 0
    %v988 = vsel %vm944, %v825, 0
    %v991 = vsel %vm944, %v826, 0
    %v994 = vsel %vm944, %v827, 0
    %v997 = vsel %vm944, %v828, 0
    %v1000 = vsel %vm944, %v829, 0
    %1002 = vmatpush.msra.mxu0 0.0
    %1003 = vmatpush.msra.mxu0 0.0
    %1004 = vmatpush.msra.mxu0 0.0
    %1005 = vmatpush.msra.mxu0 0.0
    %1006 = vmatpush.msra.mxu0 0.0
    %1007 = vmatpush.msra.mxu0 0.0
    %1008 = vmatpush.msra.mxu0 0.0
    %1009 = vmatpush.msra.mxu0 0.0
    %1010 = vmatpush.msra.mxu0 0.0
    %1011 = vmatpush.msra.mxu0 0.0
    %1012 = vmatpush.msra.mxu0 0.0
    %1013 = vmatpush.msra.mxu0 %v795
    %1014 = vmatpush.msra.mxu0 %v794
    %1015 = vmatpush.msra.mxu0 %v793
    %1016 = vmatpush.msra.mxu0 %v792
    %1017 = vmatpush.msra.mxu0 %v791
    %1018 = vmatmul.f32.gmra.mxu0 %v946
    %v1019 = vpop.f32.mrf.mxu0
    %v1020 = vadd.f32 %v852, %v1019
    %1021 = vmatmul.f32.gmra.mxu0 %v949
    %v1022 = vpop.f32.mrf.mxu0
    %v1023 = vadd.f32 %v857, %v1022
    %1024 = vmatmul.f32.gmra.mxu0 %v952
    %v1025 = vpop.f32.mrf.mxu0
    %v1026 = vadd.f32 %v862, %v1025
    %1027 = vmatmul.f32.gmra.mxu0 %v955
    %v1028 = vpop.f32.mrf.mxu0
    %v1029 = vadd.f32 %v867, %v1028
    %1030 = vmatmul.f32.gmra.mxu0 %v958
    %v1031 = vpop.f32.mrf.mxu0
    %v1032 = vadd.f32 %v872, %v1031
    %1033 = vmatmul.f32.gmra.mxu0 %v961
    %v1034 = vpop.f32.mrf.mxu0
    %v1035 = vadd.f32 %v877, %v1034
    %1036 = vmatmul.f32.gmra.mxu0 %v964
    %v1037 = vpop.f32.mrf.mxu0
    %v1038 = vadd.f32 %v882, %v1037
    %1039 = vmatmul.f32.gmra.mxu0 %v967
    %v1040 = vpop.f32.mrf.mxu0
    %v1041 = vadd.f32 %v887, %v1040
    %1042 = vmatmul.f32.gmra.mxu0 %v970
    %v1043 = vpop.f32.mrf.mxu0
    %v1044 = vadd.f32 %v892, %v1043
    %1045 = vmatmul.f32.gmra.mxu0 %v973
    %v1046 = vpop.f32.mrf.mxu0
    %v1047 = vadd.f32 %v897, %v1046
    %1048 = vmatmul.f32.gmra.mxu0 %v976
    %v1049 = vpop.f32.mrf.mxu0
    %v1050 = vadd.f32 %v902, %v1049
    %1051 = vmatmul.f32.gmra.mxu0 %v979
    %v1052 = vpop.f32.mrf.mxu0
    %v1053 = vadd.f32 %v907, %v1052
    %1054 = vmatmul.f32.gmra.mxu0 %v982
    %v1055 = vpop.f32.mrf.mxu0
    %v1056 = vadd.f32 %v912, %v1055
    %1057 = vmatmul.f32.gmra.mxu0 %v985
    %v1058 = vpop.f32.mrf.mxu0
    %v1059 = vadd.f32 %v917, %v1058
    %1060 = vmatmul.f32.gmra.mxu0 %v988
    %v1061 = vpop.f32.mrf.mxu0
    %v1062 = vadd.f32 %v922, %v1061
    %1063 = vmatmul.f32.gmra.mxu0 %v991
    %v1064 = vpop.f32.mrf.mxu0
    %v1065 = vadd.f32 %v927, %v1064
    %1066 = vmatmul.f32.gmra.mxu0 %v994
    %v1067 = vpop.f32.mrf.mxu0
    %v1068 = vadd.f32 %v932, %v1067
    %1069 = vmatmul.f32.gmra.mxu0 %v997
    %v1070 = vpop.f32.mrf.mxu0
    %v1071 = vadd.f32 %v937, %v1070
    %1072 = vmatmul.f32.gmra.mxu0 %v1000
    %v1073 = vpop.f32.mrf.mxu0
    %v1074 = vadd.f32 %v942, %v1073
    %1075 = vdwg.mxu0
    %1076 = vmatpush.msra.mxu0 0.0
    %1077 = vmatpush.msra.mxu0 0.0
    %1078 = vmatpush.msra.mxu0 0.0
    %1079 = vmatpush.msra.mxu0 0.0
    %1080 = vmatpush.msra.mxu0 0.0
    %1081 = vmatpush.msra.mxu0 0.0
    %1082 = vmatpush.msra.mxu0 0.0
    %1083 = vmatpush.msra.mxu0 0.0
    %1084 = vmatpush.msra.mxu0 0.0
    %1085 = vmatpush.msra.mxu0 0.0
    %1086 = vmatpush.msra.mxu0 0.0
    %1087 = vmatpush.msra.mxu0 %v810
    %1088 = vmatpush.msra.mxu0 %v809
    %1089 = vmatpush.msra.mxu0 %v808
    %1090 = vmatpush.msra.mxu0 %v807
    %1091 = vmatpush.msra.mxu0 %v806
    %1092 = vmatmul.f32.gmra.mxu0 %v946
    %v1093 = vpop.f32.mrf.mxu0
    %v1094 = vadd.f32 %v852, %v1093
    %1095 = vmatmul.f32.gmra.mxu0 %v949
    %v1096 = vpop.f32.mrf.mxu0
    %v1097 = vadd.f32 %v857, %v1096
    %1098 = vmatmul.f32.gmra.mxu0 %v952
    %v1099 = vpop.f32.mrf.mxu0
    %v1100 = vadd.f32 %v862, %v1099
    %1101 = vmatmul.f32.gmra.mxu0 %v955
    %v1102 = vpop.f32.mrf.mxu0
    %v1103 = vadd.f32 %v867, %v1102
    %1104 = vmatmul.f32.gmra.mxu0 %v958
    %v1105 = vpop.f32.mrf.mxu0
    %v1106 = vadd.f32 %v872, %v1105
    %1107 = vmatmul.f32.gmra.mxu0 %v961
    %v1108 = vpop.f32.mrf.mxu0
    %v1109 = vadd.f32 %v877, %v1108
    %1110 = vmatmul.f32.gmra.mxu0 %v964
    %v1111 = vpop.f32.mrf.mxu0
    %v1112 = vadd.f32 %v882, %v1111
    %1113 = vmatmul.f32.gmra.mxu0 %v967
    %v1114 = vpop.f32.mrf.mxu0
    %v1115 = vadd.f32 %v887, %v1114
    %1116 = vmatmul.f32.gmra.mxu0 %v970
    %v1117 = vpop.f32.mrf.mxu0
    %v1118 = vadd.f32 %v892, %v1117
    %1119 = vmatmul.f32.gmra.mxu0 %v973
    %v1120 = vpop.f32.mrf.mxu0
    %v1121 = vadd.f32 %v897, %v1120
    %1122 = vmatmul.f32.gmra.mxu0 %v976
    %v1123 = vpop.f32.mrf.mxu0
    %v1124 = vadd.f32 %v902, %v1123
    %1125 = vmatmul.f32.gmra.mxu0 %v979
    %v1126 = vpop.f32.mrf.mxu0
    %v1127 = vadd.f32 %v907, %v1126
    %1128 = vmatmul.f32.gmra.mxu0 %v982
    %v1129 = vpop.f32.mrf.mxu0
    %v1130 = vadd.f32 %v912, %v1129
    %1131 = vmatmul.f32.gmra.mxu0 %v985
    %v1132 = vpop.f32.mrf.mxu0
    %v1133 = vadd.f32 %v917, %v1132
    %1134 = vmatmul.f32.gmra.mxu0 %v988
    %v1135 = vpop.f32.mrf.mxu0
    %v1136 = vadd.f32 %v922, %v1135
    %1137 = vmatmul.f32.gmra.mxu0 %v991
    %v1138 = vpop.f32.mrf.mxu0
    %v1139 = vadd.f32 %v927, %v1138
    %1140 = vmatmul.f32.gmra.mxu0 %v994
    %v1141 = vpop.f32.mrf.mxu0
    %v1142 = vadd.f32 %v932, %v1141
    %1143 = vmatmul.f32.gmra.mxu0 %v997
    %v1144 = vpop.f32.mrf.mxu0
    %v1145 = vadd.f32 %v937, %v1144
    %1146 = vmatmul.f32.gmra.mxu0 %v1000
    %v1147 = vpop.f32.mrf.mxu0
    %v1148 = vadd.f32 %v942, %v1147
    %1149 = vdwg.mxu0
    %v1150 = vmax.f32 %v1020, 0.0
    %v1151 = vmax.f32 %v1094, 0.0
    %v1152 = vmax.f32 %v1023, 0.0
    %v1153 = vmax.f32 %v1097, 0.0
    %v1154 = vmax.f32 %v1026, 0.0
    %v1155 = vmax.f32 %v1100, 0.0
    %v1156 = vmax.f32 %v1029, 0.0
    %v1157 = vmax.f32 %v1103, 0.0
    %v1158 = vmax.f32 %v1032, 0.0
    %v1159 = vmax.f32 %v1106, 0.0
    %v1160 = vmax.f32 %v1035, 0.0
    %v1161 = vmax.f32 %v1109, 0.0
    %v1162 = vmax.f32 %v1038, 0.0
    %v1163 = vmax.f32 %v1112, 0.0
    %v1164 = vmax.f32 %v1041, 0.0
    %v1165 = vmax.f32 %v1115, 0.0
    %v1166 = vmax.f32 %v1044, 0.0
    %v1167 = vmax.f32 %v1118, 0.0
    %v1168 = vmax.f32 %v1047, 0.0
    %v1169 = vmax.f32 %v1121, 0.0
    %v1170 = vmax.f32 %v1050, 0.0
    %v1171 = vmax.f32 %v1124, 0.0
    %v1172 = vmax.f32 %v1053, 0.0
    %v1173 = vmax.f32 %v1127, 0.0
    %v1174 = vmax.f32 %v1056, 0.0
    %v1175 = vmax.f32 %v1130, 0.0
    %v1176 = vmax.f32 %v1059, 0.0
    %v1177 = vmax.f32 %v1133, 0.0
    %v1178 = vmax.f32 %v1062, 0.0
    %v1179 = vmax.f32 %v1136, 0.0
    %v1180 = vmax.f32 %v1065, 0.0
    %v1181 = vmax.f32 %v1139, 0.0
    %v1182 = vmax.f32 %v1068, 0.0
    %v1183 = vmax.f32 %v1142, 0.0
    %v1184 = vmax.f32 %v1071, 0.0
    %v1185 = vmax.f32 %v1145, 0.0
    %v1186 = vmax.f32 %v1074, 0.0
    %v1187 = vmax.f32 %v1148, 0.0
    %v1188 = vld [vmem:[%s7] sm:$0xff]
    %v1189 = vld [vmem:[%s7 + $0x8] sm:$0xff]
    %v1190 = vld [vmem:[%s7 + $0x10] sm:$0xff]
    %v1191 = vld [vmem:[%s7 + $0x18] sm:$0xff]
    %v1192 = vld [vmem:[%s7 + $0x20] sm:$0xff]
    %v1193 = vld [vmem:[%s7 + $0x28] sm:$0xff]
    %v1194 = vld [vmem:[%s7 + $0x30] sm:$0xff]
    %v1195 = vld [vmem:[%s7 + $0x38] sm:$0xff]
    %v1196 = vld [vmem:[%s7 + $0x40] sm:$0xff]
    %v1197 = vld [vmem:[%s7 + $0x48] sm:$0xff]
    %v1198 = vld [vmem:[%s7 + $0x50] sm:$0xff]
    %v1199 = vld [vmem:[%s7 + $0x58] sm:$0xff]
    %v1200 = vld [vmem:[%s8] sm:$0xff]
    %v1201 = vld [vmem:[%s8 + $0x8] sm:$0xff]
    %v1202 = vld [vmem:[%s8 + $0x10] sm:$0xff]
    %v1203 = vld [vmem:[%s8 + $0x18] sm:$0xff]
    %v1204 = vld [vmem:[%s8 + $0x20] sm:$0xff]
    %v1205 = vld [vmem:[%s8 + $0x28] sm:$0xff]
    %1207 = vset.pattern.permute.xlu0 0
    %1208 = vperm.xlu0 %1207, %v1200
    %v1209 = vpop.permute.xlu0 %1208
    %1212 = vset.pattern.permute.xlu0 0
    %1213 = vperm.xlu0 %1212, %v1201
    %v1214 = vpop.permute.xlu0 %1213
    %1217 = vset.pattern.permute.xlu0 0
    %1218 = vperm.xlu0 %1217, %v1202
    %v1219 = vpop.permute.xlu0 %1218
    %1222 = vset.pattern.permute.xlu0 0
    %1223 = vperm.xlu0 %1222, %v1203
    %v1224 = vpop.permute.xlu0 %1223
    %1227 = vset.pattern.permute.xlu0 0
    %1228 = vperm.xlu0 %1227, %v1204
    %v1229 = vpop.permute.xlu0 %1228
    %1232 = vset.pattern.permute.xlu0 0
    %1233 = vperm.xlu0 %1232, %v1205
    %v1234 = vpop.permute.xlu0 %1233
    %vm1236 = vcmask 162816
    %v1238 = vsel %vm1236, %v1189, 0
    %v1241 = vsel %vm1236, %v1191, 0
    %v1244 = vsel %vm1236, %v1193, 0
    %v1247 = vsel %vm1236, %v1195, 0
    %v1250 = vsel %vm1236, %v1197, 0
    %v1253 = vsel %vm1236, %v1199, 0
    %vm1255 = vcmask 1043456
    %v1257 = vsel %vm1255, %v1186, 0
    %v1260 = vsel %vm1255, %v1187, 0
    %1262 = vmatpush.msra.mxu0 %v1180
    %1263 = vmatpush.msra.mxu0 %v1178
    %1264 = vmatpush.msra.mxu0 %v1176
    %1265 = vmatpush.msra.mxu0 %v1174
    %1266 = vmatpush.msra.mxu0 %v1172
    %1267 = vmatpush.msra.mxu0 %v1170
    %1268 = vmatpush.msra.mxu0 %v1168
    %1269 = vmatpush.msra.mxu0 %v1166
    %1270 = vmatpush.msra.mxu0 %v1164
    %1271 = vmatpush.msra.mxu0 %v1162
    %1272 = vmatpush.msra.mxu0 %v1160
    %1273 = vmatpush.msra.mxu0 %v1158
    %1274 = vmatpush.msra.mxu0 %v1156
    %1275 = vmatpush.msra.mxu0 %v1154
    %1276 = vmatpush.msra.mxu0 %v1152
    %1277 = vmatpush.msra.mxu0 %v1150
    %1278 = vmatmul.f32.gmra.mxu0 %v1188
    %v1279 = vpop.f32.mrf.mxu0
    %v1280 = vadd.f32 %v1209, %v1279
    %1281 = vmatmul.f32.gmra.mxu0 %v1190
    %v1282 = vpop.f32.mrf.mxu0
    %v1283 = vadd.f32 %v1214, %v1282
    %1284 = vmatmul.f32.gmra.mxu0 %v1192
    %v1285 = vpop.f32.mrf.mxu0
    %v1286 = vadd.f32 %v1219, %v1285
    %1287 = vmatmul.f32.gmra.mxu0 %v1194
    %v1288 = vpop.f32.mrf.mxu0
    %v1289 = vadd.f32 %v1224, %v1288
    %1290 = vmatmul.f32.gmra.mxu0 %v1196
    %v1291 = vpop.f32.mrf.mxu0
    %v1292 = vadd.f32 %v1229, %v1291
    %1293 = vmatmul.f32.gmra.mxu0 %v1198
    %v1294 = vpop.f32.mrf.mxu0
    %v1295 = vadd.f32 %v1234, %v1294
    %1296 = vdwg.mxu0
    %1297 = vmatpush.msra.mxu0 0.0
    %1298 = vmatpush.msra.mxu0 0.0
    %1299 = vmatpush.msra.mxu0 0.0
    %1300 = vmatpush.msra.mxu0 0.0
    %1301 = vmatpush.msra.mxu0 0.0
    %1302 = vmatpush.msra.mxu0 0.0
    %1303 = vmatpush.msra.mxu0 0.0
    %1304 = vmatpush.msra.mxu0 0.0
    %1305 = vmatpush.msra.mxu0 0.0
    %1306 = vmatpush.msra.mxu0 0.0
    %1307 = vmatpush.msra.mxu0 0.0
    %1308 = vmatpush.msra.mxu0 0.0
    %1309 = vmatpush.msra.mxu0 0.0
    %1310 = vmatpush.msra.mxu0 %v1257
    %1311 = vmatpush.msra.mxu0 %v1184
    %1312 = vmatpush.msra.mxu0 %v1182
    %1313 = vmatmul.f32.gmra.mxu0 %v1238
    %v1314 = vpop.f32.mrf.mxu0
    %v1315 = vadd.f32 %v1280, %v1314
    %1316 = vmatmul.f32.gmra.mxu0 %v1241
    %v1317 = vpop.f32.mrf.mxu0
    %v1318 = vadd.f32 %v1283, %v1317
    %1319 = vmatmul.f32.gmra.mxu0 %v1244
    %v1320 = vpop.f32.mrf.mxu0
    %v1321 = vadd.f32 %v1286, %v1320
    %1322 = vmatmul.f32.gmra.mxu0 %v1247
    %v1323 = vpop.f32.mrf.mxu0
    %v1324 = vadd.f32 %v1289, %v1323
    %1325 = vmatmul.f32.gmra.mxu0 %v1250
    %v1326 = vpop.f32.mrf.mxu0
    %v1327 = vadd.f32 %v1292, %v1326
    %1328 = vmatmul.f32.gmra.mxu0 %v1253
    %v1329 = vpop.f32.mrf.mxu0
    %v1330 = vadd.f32 %v1295, %v1329
    %1331 = vdwg.mxu0
    %1332 = vmatpush.msra.mxu0 %v1181
    %1333 = vmatpush.msra.mxu0 %v1179
    %1334 = vmatpush.msra.mxu0 %v1177
    %1335 = vmatpush.msra.mxu0 %v1175
    %1336 = vmatpush.msra.mxu0 %v1173
    %1337 = vmatpush.msra.mxu0 %v1171
    %1338 = vmatpush.msra.mxu0 %v1169
    %1339 = vmatpush.msra.mxu0 %v1167
    %1340 = vmatpush.msra.mxu0 %v1165
    %1341 = vmatpush.msra.mxu0 %v1163
    %1342 = vmatpush.msra.mxu0 %v1161
    %1343 = vmatpush.msra.mxu0 %v1159
    %1344 = vmatpush.msra.mxu0 %v1157
    %1345 = vmatpush.msra.mxu0 %v1155
    %1346 = vmatpush.msra.mxu0 %v1153
    %1347 = vmatpush.msra.mxu0 %v1151
    %1348 = vmatmul.f32.gmra.mxu0 %v1188
    %v1349 = vpop.f32.mrf.mxu0
    %v1350 = vadd.f32 %v1209, %v1349
    %1351 = vmatmul.f32.gmra.mxu0 %v1190
    %v1352 = vpop.f32.mrf.mxu0
    %v1353 = vadd.f32 %v1214, %v1352
    %1354 = vmatmul.f32.gmra.mxu0 %v1192
    %v1355 = vpop.f32.mrf.mxu0
    %v1356 = vadd.f32 %v1219, %v1355
    %1357 = vmatmul.f32.gmra.mxu0 %v1194
    %v1358 = vpop.f32.mrf.mxu0
    %v1359 = vadd.f32 %v1224, %v1358
    %1360 = vmatmul.f32.gmra.mxu0 %v1196
    %v1361 = vpop.f32.mrf.mxu0
    %v1362 = vadd.f32 %v1229, %v1361
    %1363 = vmatmul.f32.gmra.mxu0 %v1198
    %v1364 = vpop.f32.mrf.mxu0
    %v1365 = vadd.f32 %v1234, %v1364
    %1366 = vdwg.mxu0
    %1367 = vmatpush.msra.mxu0 0.0
    %1368 = vmatpush.msra.mxu0 0.0
    %1369 = vmatpush.msra.mxu0 0.0
    %1370 = vmatpush.msra.mxu0 0.0
    %1371 = vmatpush.msra.mxu0 0.0
    %1372 = vmatpush.msra.mxu0 0.0
    %1373 = vmatpush.msra.mxu0 0.0
    %1374 = vmatpush.msra.mxu0 0.0
    %1375 = vmatpush.msra.mxu0 0.0
    %1376 = vmatpush.msra.mxu0 0.0
    %1377 = vmatpush.msra.mxu0 0.0
    %1378 = vmatpush.msra.mxu0 0.0
    %1379 = vmatpush.msra.mxu0 0.0
    %1380 = vmatpush.msra.mxu0 %v1260
    %1381 = vmatpush.msra.mxu0 %v1185
    %1382 = vmatpush.msra.mxu0 %v1183
    %1383 = vmatmul.f32.gmra.mxu0 %v1238
    %v1384 = vpop.f32.mrf.mxu0
    %v1385 = vadd.f32 %v1350, %v1384
    %1386 = vmatmul.f32.gmra.mxu0 %v1241
    %v1387 = vpop.f32.mrf.mxu0
    %v1388 = vadd.f32 %v1353, %v1387
    %1389 = vmatmul.f32.gmra.mxu0 %v1244
    %v1390 = vpop.f32.mrf.mxu0
    %v1391 = vadd.f32 %v1356, %v1390
    %1392 = vmatmul.f32.gmra.mxu0 %v1247
    %v1393 = vpop.f32.mrf.mxu0
    %v1394 = vadd.f32 %v1359, %v1393
    %1395 = vmatmul.f32.gmra.mxu0 %v1250
    %v1396 = vpop.f32.mrf.mxu0
    %v1397 = vadd.f32 %v1362, %v1396
    %1398 = vmatmul.f32.gmra.mxu0 %v1253
    %v1399 = vpop.f32.mrf.mxu0
    %v1400 = vadd.f32 %v1365, %v1399
    %1401 = vdwg.mxu0
    %1402 = vst [vmem:[#allocation2] sm:$0xff] %v1315
    %1403 = vst [vmem:[#allocation2 + $0x8] sm:$0xff] %v1385
    %1404 = vst [vmem:[#allocation2 + $0x10] sm:$0xff] %v1318
    %1405 = vst [vmem:[#allocation2 + $0x18] sm:$0xff] %v1388
    %1406 = vst [vmem:[#allocation2 + $0x20] sm:$0xff] %v1321
    %1407 = vst [vmem:[#allocation2 + $0x28] sm:$0xff] %v1391
    %1408 = vst [vmem:[#allocation2 + $0x30] sm:$0xff] %v1324
    %1409 = vst [vmem:[#allocation2 + $0x38] sm:$0xff] %v1394
    %1410 = vst [vmem:[#allocation2 + $0x40] sm:$0xff] %v1327
    %1411 = vst [vmem:[#allocation2 + $0x48] sm:$0xff] %v1397
    %1412 = vst [vmem:[#allocation2 + $0x50] sm:$0xff] %v1330
    %1413 = vst [vmem:[#allocation2 + $0x58] sm:$0xff] %v1400
    // Predicated region
    $region38: #{tpu_custom_call.1} parent=1 // pred_check
      _
    $region39: #{tpu_custom_call.1} parent=1 // pred_check_branch
      %1415 = sbr.rel (0) target = $region41
    $region40: #{tpu_custom_call.1} parent=1 // pred_region
      %1417 = vsyncadd [#allocation3], 0
      %s1418 = sshll.u32 [#allocation2], 4
      %s1419 = int_to_ptr.vmem [resolvable:$true] %s1418
      %s1420 = sshll.u32 %s9, 4
      %s1421 = int_to_ptr.hbm [resolvable:$true] %s1420
      %1426 = dma.vmem_to_hbm [thread:$0]  %s1419, 1536, %s1421, [#allocation3], 256, 256, 16
    $region41: #{tpu_custom_call.1} parent=1 // pred_fallthru
      _
    // Predicated region
    $region42: #{tpu_custom_call.1} parent=1 // pred_check
      _
    $region43: #{tpu_custom_call.1} parent=1 // pred_check_branch
      %1428 = sbr.rel (0) target = $region45
    $region44: #{tpu_custom_call.1} parent=1 // pred_region
      %1430 = dma.done [#allocation3], 1536
    $region45: #{tpu_custom_call.1} parent=1 // pred_fallthru
      _
    %1431 = vsyncpa [#allocation3], 1

</llo_original>
